<compile_context>
chip_gen: v6e
topology: v6e:2x2x1
jax: 0.10.0
libtpu: 0.0.40
codegen_flags: <defaults>
</compile_context>

<pallas_src>
import functools

import jax
import jax.numpy as jnp
from jax.experimental import pallas as pl
from jax.experimental.pallas import tpu as pltpu


def _round_up(x: int, m: int) -> int:
    return ((x + m - 1) // m) * m


def mdn_kernel(xT_ref, w1T_ref, b1_ref, w2T_ref, b2_ref, out_ref, *, use_bf16):
    # Transposed layout: batch on lanes.
    xT = xT_ref[...]                      # (D_in, TN)   f32
    w1T = w1T_ref[...]                    # (H,    D_in) f32 (resident)
    w2T = w2T_ref[...]                    # (D_out, H)   f32 (resident)

    if use_bf16:                          # MXU operands only; accumulate in f32
        xT = xT.astype(jnp.bfloat16)
        w1T = w1T.astype(jnp.bfloat16)
        w2T = w2T.astype(jnp.bfloat16)

    # h = W1^T @ x^T + b1  -> (H, TN)
    h = jnp.dot(w1T, xT, preferred_element_type=jnp.float32) + b1_ref[...]
    act = jnp.tanh(h)                     # (H, TN) f32 (EUP)

    act_mm = act.astype(jnp.bfloat16) if use_bf16 else act
    # logits = W2^T @ act + b2 -> (D_out, TN)
    logits = jnp.dot(w2T, act_mm, preferred_element_type=jnp.float32) + b2_ref[...]

    # Numerically stable softmax over the class axis (axis=0 here == dim=1 of
    # the original (N, D_out) layout).  Only D_out=4 sublanes to reduce over.
    m = jnp.max(logits, axis=0, keepdims=True)
    e = jnp.exp(logits - m)
    denom = jnp.sum(e, axis=0, keepdims=True)
    # exact reciprocal (approx=True would risk the 1e-5 tolerance)
    out_ref[...] = (e * pl.reciprocal(denom, approx=False)).astype(out_ref.dtype)


def classification_single_layer_mdn(x, w1, b1, w2, b2, *,
                                    block_n: int = 512,
                                    use_bf16: bool = False):
    """Pallas forward pass.

    x : (N, D_in) f32
    w1: (D_in, H) f32,  b1: (1, H) f32     (== nn.Linear(D_in, H), W transposed)
    w2: (H, D_out) f32, b2: (1, D_out) f32 (== nn.Linear(H, D_out), W transposed)
    returns (N, D_out) f32 softmax probabilities.
    """
    n, d_in = x.shape
    hidden = w1.shape[1]
    d_out = w2.shape[1]

    # Batch tile: multiple of 128 lanes; >=512 for good pipelining on big N,
    # but never larger than the (128-rounded) batch itself.
    tn = min(block_n, _round_up(n, 128))
    n_pad = _round_up(n, tn)

    # Layout plumbing in the wrapper (once): batch -> lanes, weights transposed
    # to (out, in) so the kernel's dots are plain row-major MXU contractions.
    xT = jnp.pad(x.T, ((0, 0), (0, n_pad - n)))         # (D_in, n_pad)
    w1T = w1.T                                          # (H, D_in)
    b1c = b1.reshape(hidden, 1)                         # (H, 1)
    w2T = w2.T                                          # (D_out, H)
    b2c = b2.reshape(d_out, 1)                          # (D_out, 1)

    grid = (n_pad // tn,)

    flops = 2 * n_pad * (d_in * hidden + hidden * d_out)
    transcendentals = n_pad * (hidden + d_out)          # tanh + exp
    bytes_accessed = 4 * (n_pad * d_in + n_pad * d_out
                          + d_in * hidden + hidden + hidden * d_out + d_out)

    outT = pl.pallas_call(
        functools.partial(mdn_kernel, use_bf16=use_bf16),
        out_shape=jax.ShapeDtypeStruct((d_out, n_pad), jnp.float32),
        grid=grid,
        in_specs=[
            pl.BlockSpec((d_in, tn), lambda i: (0, i)),        # x tile (pipelined)
            pl.BlockSpec((hidden, d_in), lambda i: (0, 0)),    # W1^T  (resident)
            pl.BlockSpec((hidden, 1), lambda i: (0, 0)),       # b1    (resident)
            pl.BlockSpec((d_out, hidden), lambda i: (0, 0)),   # W2^T  (resident)
            pl.BlockSpec((d_out, 1), lambda i: (0, 0)),        # b2    (resident)
        ],
        out_specs=pl.BlockSpec((d_out, tn), lambda i: (0, i)),  # lane-dense store
        compiler_params=pltpu.CompilerParams(
            dimension_semantics=("parallel",)),
        cost_estimate=pl.CostEstimate(
            flops=flops,
            transcendentals=transcendentals,
            bytes_accessed=bytes_accessed),
    )(xT, w1T, b1c, w2T, b2c)

    # back to the PyTorch (N, D_out) convention, dropping the padded rows
    return outT[:, :n].T


def reference(x, w1, b1, w2, b2):
    act = jnp.tanh(x @ w1 + b1)
    logits = act @ w2 + b2
    return jax.nn.softmax(logits, axis=1)


if __name__ == "__main__":
    # Small shapes consistent with the module: (n_samples, n_features)
    N, D_IN, HIDDEN, D_OUT = 8, 4, 32, 4

    key = jax.random.PRNGKey(0)
    kx, kw1, kb1, kw2, kb2 = jax.random.split(key, 5)

    x = jax.random.normal(kx, (N, D_IN), dtype=jnp.float32)
    w1 = jax.random.normal(kw1, (D_IN, HIDDEN), dtype=jnp.float32) * 0.2
    b1 = jax.random.normal(kb1, (1, HIDDEN), dtype=jnp.float32) * 0.1
    w2 = jax.random.normal(kw2, (HIDDEN, D_OUT), dtype=jnp.float32) * 0.2
    b2 = jax.random.normal(kb2, (1, D_OUT), dtype=jnp.float32) * 0.1

    out = classification_single_layer_mdn(x, w1, b1, w2, b2)
    jax.block_until_ready(out)

    ref = reference(x, w1, b1, w2, b2)
    assert out.shape == (N, D_OUT)
    assert jnp.allclose(out, ref, atol=1e-5, rtol=1e-5)
    assert jnp.allclose(jnp.sum(out, axis=1), jnp.ones((N,)), atol=1e-5)

    # Exercise the batch grid + padding path (multiple grid steps, ragged N).
    N2 = 300
    x2 = jax.random.normal(jax.random.PRNGKey(1), (N2, D_IN), dtype=jnp.float32)
    out2 = classification_single_layer_mdn(x2, w1, b1, w2, b2, block_n=128)
    jax.block_until_ready(out2)
    ref2 = reference(x2, w1, b1, w2, b2)
    assert out2.shape == (N2, D_OUT)
    assert jnp.allclose(out2, ref2, atol=1e-5, rtol=1e-5)

    print("KERNEL_OK")
</pallas_src>

<mosaic_0001>
module attributes {stable_mosaic.version = 11 : i64} {
  func.func @mdn_kernel(%arg0: i32, %arg1: memref<4x128xf32, #tpu.memory_space<vmem>>, %arg2: memref<32x4xf32, #tpu.memory_space<vmem>>, %arg3: memref<32x1xf32, #tpu.memory_space<vmem>>, %arg4: memref<4x32xf32, #tpu.memory_space<vmem>>, %arg5: memref<4x1xf32, #tpu.memory_space<vmem>>, %arg6: memref<4x128xf32, #tpu.memory_space<vmem>>) attributes {dimension_semantics = [#tpu.dimension_semantics<parallel>], iteration_bounds = array<i64: 1>, scalar_prefetch = 0 : i64, scratch_operands = 0 : i64, tpu.core_type = #tpu.core_type<tc>, window_params = [{transform_indices = @transform_0, window_bounds = array<i64: 4, 128>}, {pipeline_mode = #tpu.pipeline_mode<synchronous>, transform_indices = @transform_1, window_bounds = array<i64: 32, 4>}, {pipeline_mode = #tpu.pipeline_mode<synchronous>, transform_indices = @transform_2, window_bounds = array<i64: 32, 1>}, {pipeline_mode = #tpu.pipeline_mode<synchronous>, transform_indices = @transform_3, window_bounds = array<i64: 4, 32>}, {pipeline_mode = #tpu.pipeline_mode<synchronous>, transform_indices = @transform_4, window_bounds = array<i64: 4, 1>}, {transform_indices = @transform_5, window_bounds = array<i64: 4, 128>}]} {
    %c0 = arith.constant 0 : index
    %c0_0 = arith.constant 0 : index
    %0 = vector.load %arg1[%c0, %c0_0] : memref<4x128xf32, #tpu.memory_space<vmem>>, vector<4x128xf32>
    %c0_1 = arith.constant 0 : index
    %c0_2 = arith.constant 0 : index
    %1 = vector.load %arg2[%c0_1, %c0_2] : memref<32x4xf32, #tpu.memory_space<vmem>>, vector<32x4xf32>
    %c0_3 = arith.constant 0 : index
    %c0_4 = arith.constant 0 : index
    %2 = vector.load %arg4[%c0_3, %c0_4] : memref<4x32xf32, #tpu.memory_space<vmem>>, vector<4x32xf32>
    %cst = arith.constant dense<0.000000e+00> : vector<32x128xf32>
    %3 = tpu.matmul %1, %0, %cst {dimension_numbers = #tpu.dot_dimension_numbers<[1], [0], [0], [1], [0, 0, 1, 1], [], []>} : vector<32x4xf32>, vector<4x128xf32>, vector<32x128xf32> -> vector<32x128xf32>
    %c0_5 = arith.constant 0 : index
    %c0_6 = arith.constant 0 : index
    %4 = vector.load %arg3[%c0_5, %c0_6] : memref<32x1xf32, #tpu.memory_space<vmem>>, vector<32x1xf32>
    %5 = vector.broadcast %4 : vector<32x1xf32> to vector<32x128xf32>
    %6 = arith.addf %3, %5 : vector<32x128xf32>
    %7 = math.tanh %6 : vector<32x128xf32>
    %cst_7 = arith.constant dense<0.000000e+00> : vector<4x128xf32>
    %8 = tpu.matmul %2, %7, %cst_7 {dimension_numbers = #tpu.dot_dimension_numbers<[1], [0], [0], [1], [0, 0, 1, 1], [], []>} : vector<4x32xf32>, vector<32x128xf32>, vector<4x128xf32> -> vector<4x128xf32>
    %c0_8 = arith.constant 0 : index
    %c0_9 = arith.constant 0 : index
    %9 = vector.load %arg5[%c0_8, %c0_9] : memref<4x1xf32, #tpu.memory_space<vmem>>, vector<4x1xf32>
    %10 = vector.broadcast %9 : vector<4x1xf32> to vector<4x128xf32>
    %11 = arith.addf %8, %10 : vector<4x128xf32>
    %cst_10 = arith.constant dense<0xFF800000> : vector<128xf32>
    %12 = vector.multi_reduction <maximumf>, %11, %cst_10 [0] : vector<4x128xf32> to vector<128xf32>
    %13 = vector.shape_cast %12 : vector<128xf32> to vector<1x128xf32>
    %14 = vector.broadcast %13 : vector<1x128xf32> to vector<4x128xf32>
    %15 = arith.subf %11, %14 : vector<4x128xf32>
    %16 = math.exp %15 : vector<4x128xf32>
    %cst_11 = arith.constant dense<0.000000e+00> : vector<128xf32>
    %17 = vector.multi_reduction <add>, %16, %cst_11 [0] : vector<4x128xf32> to vector<128xf32>
    %18 = vector.shape_cast %17 : vector<128xf32> to vector<1x128xf32>
    %19 = tpu.reciprocal %18 : vector<1x128xf32> -> vector<1x128xf32>
    %20 = vector.broadcast %19 : vector<1x128xf32> to vector<4x128xf32>
    %21 = arith.mulf %16, %20 : vector<4x128xf32>
    %c0_12 = arith.constant 0 : index
    %c0_13 = arith.constant 0 : index
    %22 = vector.load %arg6[%c0_12, %c0_13] : memref<4x128xf32, #tpu.memory_space<vmem>>, vector<4x128xf32>
    tpu.vector_store %arg6[%c0_12, %c0_13], %21 {strides = array<i32>} : memref<4x128xf32, #tpu.memory_space<vmem>>, vector<4x128xf32>,
    return
  }
  func.func @transform_0(%arg0: i32) -> (i32, i32) {
    %c0_i32 = arith.constant 0 : i32
    %c0_i32_0 = arith.constant 0 : i32
    return %c0_i32, %arg0 : i32, i32
  }
  func.func @transform_1(%arg0: i32) -> (i32, i32) {
    %c0_i32 = arith.constant 0 : i32
    %c0_i32_0 = arith.constant 0 : i32
    %c0_i32_1 = arith.constant 0 : i32
    return %c0_i32, %c0_i32_0 : i32, i32
  }
  func.func @transform_2(%arg0: i32) -> (i32, i32) {
    %c0_i32 = arith.constant 0 : i32
    %c0_i32_0 = arith.constant 0 : i32
    %c0_i32_1 = arith.constant 0 : i32
    return %c0_i32, %c0_i32_0 : i32, i32
  }
  func.func @transform_3(%arg0: i32) -> (i32, i32) {
    %c0_i32 = arith.constant 0 : i32
    %c0_i32_0 = arith.constant 0 : i32
    %c0_i32_1 = arith.constant 0 : i32
    return %c0_i32, %c0_i32_0 : i32, i32
  }
  func.func @transform_4(%arg0: i32) -> (i32, i32) {
    %c0_i32 = arith.constant 0 : i32
    %c0_i32_0 = arith.constant 0 : i32
    %c0_i32_1 = arith.constant 0 : i32
    return %c0_i32, %c0_i32_0 : i32, i32
  }
  func.func @transform_5(%arg0: i32) -> (i32, i32) {
    %c0_i32 = arith.constant 0 : i32
    %c0_i32_0 = arith.constant 0 : i32
    return %c0_i32, %arg0 : i32, i32
  }
}

</mosaic_0001>

<llo_original>
// kernel: tpu_custom_call.1
$region0: #{tpu_custom_call.1}
  #allocation0 [shape = 'u32[]', space=smem, size = 0x4, offset = 0x4, fixed_abs, tag = 'smem constant byte address 0x4 - core index']
  #allocation1 [shape = 'u32[144,128]{1,0:T(1,128)}', space=vmem, size = 0x12000, scoped, tag = 'internal scratch']
  %s0 = inlined_call_operand.vmem [shape: f32[4,128], index: 0, kind: input, shape index: {}]
  %s1 = inlined_call_operand.vmem [shape: f32[32,4], index: 1, kind: input, shape index: {}]
  %s2 = inlined_call_operand.vmem [shape: f32[32,1], index: 2, kind: input, shape index: {}]
  %s3 = inlined_call_operand.vmem [shape: f32[4,32], index: 3, kind: input, shape index: {}]
  %s4 = inlined_call_operand.vmem [shape: f32[4,1], index: 4, kind: input, shape index: {}]
  %s5 = inlined_call_operand.hbm [shape: f32[4,128], index: 5, kind: output, shape index: {}]
  %s6 = sld [smem:[#allocation0]]
  $region30: #{tpu_custom_call.1} parent=0
    _
  %s8 = ssub.s32 1, %s6
  %s9 = scalar_select 0, %s8, %s6
  $region1: #{tpu_custom_call.1} parent=0
    #allocation2 [shape = 'u8[2048]{0}', space=vmem, size = 0x800, scoped, tag = 'output window, operand 0, single buffered']
    #allocation3 [shape = 's32[1]{0}', space=sflag, size = 0x4, scoped, tag = 'scoped memory for tpu_custom_call.1']
    %10 = vsyncpa [#allocation3], 0
    // Predicated region
    $region2: #{tpu_custom_call.1} parent=1 // pred_check
      _
    $region3: #{tpu_custom_call.1} parent=1 // pred_check_branch
      %12 = sbr.rel (0) target = $region5
    $region4: #{tpu_custom_call.1} parent=1 // pred_region
      _
    $region5: #{tpu_custom_call.1} parent=1 // pred_fallthru
      _
    // Predicated region
    $region6: #{tpu_custom_call.1} parent=1 // pred_check
      _
    $region7: #{tpu_custom_call.1} parent=1 // pred_check_branch
      %14 = sbr.rel (0) target = $region9
    $region8: #{tpu_custom_call.1} parent=1 // pred_region
      _
    $region9: #{tpu_custom_call.1} parent=1 // pred_fallthru
      _
    // Predicated region
    $region10: #{tpu_custom_call.1} parent=1 // pred_check
      _
    $region11: #{tpu_custom_call.1} parent=1 // pred_check_branch
      %16 = sbr.rel (0) target = $region13
    $region12: #{tpu_custom_call.1} parent=1 // pred_region
      _
    $region13: #{tpu_custom_call.1} parent=1 // pred_fallthru
      _
    // Predicated region
    $region14: #{tpu_custom_call.1} parent=1 // pred_check
      _
    $region15: #{tpu_custom_call.1} parent=1 // pred_check_branch
      %18 = sbr.rel (0) target = $region17
    $region16: #{tpu_custom_call.1} parent=1 // pred_region
      _
    $region17: #{tpu_custom_call.1} parent=1 // pred_fallthru
      _
    // Predicated region
    $region18: #{tpu_custom_call.1} parent=1 // pred_check
      _
    $region19: #{tpu_custom_call.1} parent=1 // pred_check_branch
      %20 = sbr.rel (0) target = $region21
    $region20: #{tpu_custom_call.1} parent=1 // pred_region
      _
    $region21: #{tpu_custom_call.1} parent=1 // pred_fallthru
      _
    %v21 = vld [vmem:[%s0] sm:$0xf]
    %v22 = vld [vmem:[%s1] sm:$0xff]
    %v23 = vld [vmem:[%s1 + $0x8] sm:$0xff]
    %v24 = vld [vmem:[%s1 + $0x10] sm:$0xff]
    %v25 = vld [vmem:[%s1 + $0x18] sm:$0xff]
    %v26 = vld [vmem:[%s3] sm:$0xf]
    %v27 = vld [vmem:[%s2] sm:$0xff]
    %v28 = vld [vmem:[%s2 + $0x8] sm:$0xff]
    %v29 = vld [vmem:[%s2 + $0x10] sm:$0xff]
    %v30 = vld [vmem:[%s2 + $0x18] sm:$0xff]
    %32 = vset.pattern.permute.xlu0 0
    %33 = vperm.xlu0 %32, %v27
    %v34 = vpop.permute.xlu0 %33
    %37 = vset.pattern.permute.xlu0 0
    %38 = vperm.xlu0 %37, %v28
    %v39 = vpop.permute.xlu0 %38
    %42 = vset.pattern.permute.xlu0 0
    %43 = vperm.xlu0 %42, %v29
    %v44 = vpop.permute.xlu0 %43
    %47 = vset.pattern.permute.xlu0 0
    %48 = vperm.xlu0 %47, %v30
    %v49 = vpop.permute.xlu0 %48
    %vm51 = vcmask 31744
    %v53 = vsel %vm51, %v22, 0
    %v56 = vsel %vm51, %v23, 0
    %v59 = vsel %vm51, %v24, 0
    %v62 = vsel %vm51, %v25, 0
    %vm64 = vcmask 1043456
    %v66 = vsel %vm64, %v21, 0
    %68 = vmatprep.subr.mxu0 0.0
    %69 = vmatpush1.msra.mxu0 0.0
    %70 = vmatprep.subr.mxu0 0.0
    %71 = vmatpush1.msra.mxu0 0.0
    %72 = vmatprep.subr.mxu0 0.0
    %73 = vmatpush1.msra.mxu0 0.0
    %74 = vmatprep.subr.mxu0 0.0
    %75 = vmatpush1.msra.mxu0 0.0
    %76 = vmatprep.subr.mxu0 0.0
    %77 = vmatpush1.msra.mxu0 0.0
    %78 = vmatprep.subr.mxu0 0.0
    %79 = vmatpush1.msra.mxu0 0.0
    %80 = vmatprep.subr.mxu0 0.0
    %81 = vmatpush1.msra.mxu0 0.0
    %82 = vmatprep.subr.mxu0 0.0
    %83 = vmatpush1.msra.mxu0 0.0
    %84 = vmatprep.subr.mxu0 0.0
    %85 = vmatpush1.msra.mxu0 0.0
    %86 = vmatprep.subr.mxu0 0.0
    %87 = vmatpush1.msra.mxu0 0.0
    %88 = vmatprep.subr.mxu0 0.0
    %89 = vmatpush1.msra.mxu0 0.0
    %90 = vmatprep.subr.mxu0 0.0
    %91 = vmatpush1.msra.mxu0 0.0
    %92 = vmatprep.subr.mxu0 0.0
    %93 = vmatpush1.msra.mxu0 0.0
    %94 = vmatprep.subr.mxu0 0.0
    %95 = vmatpush1.msra.mxu0 0.0
    %96 = vmatprep.subr.mxu0 0.0
    %97 = vmatpush1.msra.mxu0 0.0
    %98 = vmatprep.subr.mxu0 0.0
    %99 = vmatpush1.msra.mxu0 %v66
    %100 = vmatprep.subr.mxu0 0.0
    %101 = vmatpush2.msra.mxu0 0.0
    %102 = vmatprep.subr.mxu0 0.0
    %103 = vmatpush2.msra.mxu0 0.0
    %104 = vmatprep.subr.mxu0 0.0
    %105 = vmatpush2.msra.mxu0 0.0
    %106 = vmatprep.subr.mxu0 0.0
    %107 = vmatpush2.msra.mxu0 0.0
    %108 = vmatprep.subr.mxu0 0.0
    %109 = vmatpush2.msra.mxu0 0.0
    %110 = vmatprep.subr.mxu0 0.0
    %111 = vmatpush2.msra.mxu0 0.0
    %112 = vmatprep.subr.mxu0 0.0
    %113 = vmatpush2.msra.mxu0 0.0
    %114 = vmatprep.subr.mxu0 0.0
    %115 = vmatpush2.msra.mxu0 0.0
    %116 = vmatprep.subr.mxu0 0.0
    %117 = vmatpush2.msra.mxu0 0.0
    %118 = vmatprep.subr.mxu0 0.0
    %119 = vmatpush2.msra.mxu0 0.0
    %120 = vmatprep.subr.mxu0 0.0
    %121 = vmatpush2.msra.mxu0 0.0
    %122 = vmatprep.subr.mxu0 0.0
    %123 = vmatpush2.msra.mxu0 0.0
    %124 = vmatprep.subr.mxu0 0.0
    %125 = vmatpush2.msra.mxu0 0.0
    %126 = vmatprep.subr.mxu0 0.0
    %127 = vmatpush2.msra.mxu0 0.0
    %128 = vmatprep.subr.mxu0 0.0
    %129 = vmatpush2.msra.mxu0 0.0
    %130 = vmatprep.subr.mxu0 0.0
    %131 = vmatpush2.msra.mxu0 0.0
    %132 = vmatprep.mubr.f32.mxu0 0.0
    %133 = vmatmul.mubr.f32.gmra.mxu0 %v53
    %v134 = vpop.f32.mrf.mxu0
    %v135 = vadd.f32 %v34, %v134
    %v136 = vpop.f32.mrf.mxu0
    %137 = vmatprep.mubr.f32.mxu0 0.0
    %138 = vmatmul.mubr.f32.gmra.mxu0 %v56
    %v139 = vpop.f32.mrf.mxu0
    %v140 = vadd.f32 %v39, %v139
    %v141 = vpop.f32.mrf.mxu0
    %142 = vmatprep.mubr.f32.mxu0 0.0
    %143 = vmatmul.mubr.f32.gmra.mxu0 %v59
    %v144 = vpop.f32.mrf.mxu0
    %v145 = vadd.f32 %v44, %v144
    %v146 = vpop.f32.mrf.mxu0
    %147 = vmatprep.mubr.f32.mxu0 0.0
    %148 = vmatmul.mubr.f32.gmra.mxu0 %v62
    %v149 = vpop.f32.mrf.mxu0
    %v150 = vadd.f32 %v49, %v149
    %v151 = vpop.f32.mrf.mxu0
    %152 = vdwg.mxu0
    %v153 = vtanh.pop %v135
    %v154 = vtanh.pop %v140
    %v155 = vtanh.pop %v145
    %v156 = vtanh.pop %v150
    %v157 = vld [vmem:[%s4] sm:$0xf]
    %159 = vset.pattern.permute.xlu0 0
    %160 = vperm.xlu0 %159, %v157
    %v161 = vpop.permute.xlu0 %160
    %vm163 = vcmask 261120
    %v165 = vsel %vm163, %v26, 0
    %167 = vmatprep.subr.mxu0 0.0
    %168 = vmatpush1.msra.mxu0 0.0
    %169 = vmatprep.subr.mxu0 0.0
    %170 = vmatpush1.msra.mxu0 0.0
    %171 = vmatprep.subr.mxu0 0.0
    %172 = vmatpush1.msra.mxu0 0.0
    %173 = vmatprep.subr.mxu0 0.0
    %174 = vmatpush1.msra.mxu0 0.0
    %175 = vmatprep.subr.mxu0 0.0
    %176 = vmatpush1.msra.mxu0 0.0
    %177 = vmatprep.subr.mxu0 0.0
    %178 = vmatpush1.msra.mxu0 0.0
    %179 = vmatprep.subr.mxu0 0.0
    %180 = vmatpush1.msra.mxu0 0.0
    %181 = vmatprep.subr.mxu0 0.0
    %182 = vmatpush1.msra.mxu0 0.0
    %183 = vmatprep.subr.mxu0 0.0
    %184 = vmatpush1.msra.mxu0 0.0
    %185 = vmatprep.subr.mxu0 0.0
    %186 = vmatpush1.msra.mxu0 0.0
    %187 = vmatprep.subr.mxu0 0.0
    %188 = vmatpush1.msra.mxu0 0.0
    %189 = vmatprep.subr.mxu0 0.0
    %190 = vmatpush1.msra.mxu0 0.0
    %191 = vmatprep.subr.mxu0 0.0
    %192 = vmatpush1.msra.mxu0 %v156
    %193 = vmatprep.subr.mxu0 0.0
    %194 = vmatpush1.msra.mxu0 %v155
    %195 = vmatprep.subr.mxu0 0.0
    %196 = vmatpush1.msra.mxu0 %v154
    %197 = vmatprep.subr.mxu0 0.0
    %198 = vmatpush1.msra.mxu0 %v153
    %199 = vmatprep.subr.mxu0 0.0
    %200 = vmatpush2.msra.mxu0 0.0
    %201 = vmatprep.subr.mxu0 0.0
    %202 = vmatpush2.msra.mxu0 0.0
    %203 = vmatprep.subr.mxu0 0.0
    %204 = vmatpush2.msra.mxu0 0.0
    %205 = vmatprep.subr.mxu0 0.0
    %206 = vmatpush2.msra.mxu0 0.0
    %207 = vmatprep.subr.mxu0 0.0
    %208 = vmatpush2.msra.mxu0 0.0
    %209 = vmatprep.subr.mxu0 0.0
    %210 = vmatpush2.msra.mxu0 0.0
    %211 = vmatprep.subr.mxu0 0.0
    %212 = vmatpush2.msra.mxu0 0.0
    %213 = vmatprep.subr.mxu0 0.0
    %214 = vmatpush2.msra.mxu0 0.0
    %215 = vmatprep.subr.mxu0 0.0
    %216 = vmatpush2.msra.mxu0 0.0
    %217 = vmatprep.subr.mxu0 0.0
    %218 = vmatpush2.msra.mxu0 0.0
    %219 = vmatprep.subr.mxu0 0.0
    %220 = vmatpush2.msra.mxu0 0.0
    %221 = vmatprep.subr.mxu0 0.0
    %222 = vmatpush2.msra.mxu0 0.0
    %223 = vmatprep.subr.mxu0 0.0
    %224 = vmatpush2.msra.mxu0 0.0
    %225 = vmatprep.subr.mxu0 0.0
    %226 = vmatpush2.msra.mxu0 0.0
    %227 = vmatprep.subr.mxu0 0.0
    %228 = vmatpush2.msra.mxu0 0.0
    %229 = vmatprep.subr.mxu0 0.0
    %230 = vmatpush2.msra.mxu0 0.0
    %231 = vmatprep.mubr.f32.mxu0 0.0
    %232 = vmatmul.mubr.f32.gmra.mxu0 %v165
    %v233 = vpop.f32.mrf.mxu0
    %v234 = vadd.f32 %v161, %v233
    %v235 = vpop.f32.mrf.mxu0
    %236 = vdwg.mxu0
    %v237 = vsel %vm64, %v234, -inf
    %v238 = vrot.slane %v237, 4
    %v239 = vmax.f32 %v237, %v238
    %v240 = vrot.slane %v239, 2
    %v241 = vmax.f32 %v239, %v240
    %v242 = vrot.slane %v241, 1
    %v243 = vmax.f32 %v241, %v242
    %v244 = vsub.f32 %v234, %v243
    %v245 = vmul.f32 %v244, 1.442695
    %v246 = vpow.pop %v245
    %v247 = vsel %vm64, %v246, 0.0
    %v248 = vrot.slane %v247, 4
    %v249 = vadd.f32 %v247, %v248
    %v250 = vrot.slane %v249, 2
    %v251 = vadd.f32 %v249, %v250
    %v252 = vrot.slane %v251, 1
    %v253 = vadd.f32 %v251, %v252
    %v254 = vrcp.pop %v253
    %v255 = vmul.f32 %v246, %v254
    %256 = vst [vmem:[#allocation2] sm:$0xf] %v255
    // Predicated region
    $region22: #{tpu_custom_call.1} parent=1 // pred_check
      _
    $region23: #{tpu_custom_call.1} parent=1 // pred_check_branch
      %258 = sbr.rel (0) target = $region25
    $region24: #{tpu_custom_call.1} parent=1 // pred_region
      %s260 = ssub.s32 64, 64
      %261 = vsyncadd [#allocation3], %s260
      %s263 = sshll.u32 [#allocation2], 4
      %s264 = int_to_ptr.vmem [resolvable:$true] %s263
      %266 = dma.vmem_to_hbm [thread:$0]  %s264, 64, %s5, [#allocation3]
    $region25: #{tpu_custom_call.1} parent=1 // pred_fallthru
      _
    // Predicated region
    $region26: #{tpu_custom_call.1} parent=1 // pred_check
      _
    $region27: #{tpu_custom_call.1} parent=1 // pred_check_branch
      %268 = sbr.rel (0) target = $region29
    $region28: #{tpu_custom_call.1} parent=1 // pred_region
      %269 = dma.done [#allocation3], 64
    $region29: #{tpu_custom_call.1} parent=1 // pred_fallthru
      _
    %270 = vsyncpa [#allocation3], 1

</llo_original>
